<compile_context>
chip_gen: v6e
topology: v6e:2x2x1
jax: 0.10.0
libtpu: 0.0.40
codegen_flags: <defaults>
</compile_context>

<pallas_src>
import functools

import jax
import jax.numpy as jnp
from jax.experimental import pallas as pl
from jax.experimental.pallas import tpu as pltpu


def _layernorm_kernel(x_ref, w_ref, b_ref, o_ref, *, eps, chunk):
    # x_ref / o_ref: (row_tile, H) block.  w_ref / b_ref: (1, H), resident
    # across the whole grid (constant index_map).
    w = w_ref[...].astype(jnp.float32)          # hoisted out of the chunk loop
    b = b_ref[...].astype(jnp.float32)

    row_tile = x_ref.shape[0]
    h = x_ref.shape[1]
    inv_h = 1.0 / h
    n_chunks = row_tile // chunk                 # static; chunk divides row_tile

    @pl.loop(0, n_chunks)
    def _(c):
        r0 = pl.multiple_of(c * chunk, chunk)
        x = x_ref[pl.ds(r0, chunk), :].astype(jnp.float32)

        # Two-pass LayerNorm statistics (numerically matches nn.LayerNorm).
        mean = jnp.sum(x, axis=-1, keepdims=True) * inv_h
        xc = x - mean
        var = jnp.sum(xc * xc, axis=-1, keepdims=True) * inv_h   # biased var
        inv = jax.lax.rsqrt(var + eps)

        o_ref[pl.ds(r0, chunk), :] = (xc * inv * w + b).astype(o_ref.dtype)


def _round_up(a, m):
    return ((a + m - 1) // m) * m


def _vmem_capacity_bytes():
    try:
        return int(pltpu.get_tpu_info().vmem_capacity_bytes)
    except Exception:
        return 64 * 1024 * 1024   # conservative fallback (v7x-sized)


def _choose_tiles(rows, hidden, dtype, vmem_cap_bytes):
    """Returns (row_tile, chunk, vmem_limit_bytes)."""
    itemsize = jnp.dtype(dtype).itemsize
    # Sublane packing: 8 rows/vreg for 32-bit, 16 for bf16, 32 for 8-bit.
    sublane = max(8, 32 // max(itemsize, 1))
    row_bytes = max(hidden * itemsize, 1)

    # Per-block DMA target (input side) and VMEM ceiling, per generation.
    if vmem_cap_bytes >= 100 * 1024 * 1024:      # v5e / v6e: 128 MiB VMEM
        target_bytes = 12 * 1024 * 1024
        vmem_cap_limit = 96 * 1024 * 1024
    else:                                        # v7x: 64 MiB VMEM
        target_bytes = 6 * 1024 * 1024
        vmem_cap_limit = 48 * 1024 * 1024

    # Compute sub-chunk: bounds the f32 working set independent of block size.
    chunk = 256
    chunk = min(chunk,
                max(sublane, (target_bytes // (4 * row_bytes)) // sublane * sublane))
    chunk = max(chunk, sublane)
    chunk = min(chunk, _round_up(rows, sublane))     # tiny problems: exact fit

    # DMA block: as many chunks as fit the target, capped near the problem size.
    row_tile = max(chunk, (target_bytes // row_bytes) // chunk * chunk)
    row_tile = min(row_tile, _round_up(rows, chunk))

    # VMEM budget: double-buffered in+out blocks + f32 chunk intermediates +
    # resident params + slack; clamped to the per-generation ceiling.
    block_bytes = row_tile * hidden * itemsize
    needed = (4 * block_bytes
              + 6 * chunk * hidden * 4
              + 4 * hidden * 4
              + (2 << 20))
    vmem_limit = int(min(vmem_cap_limit, max(32 * 1024 * 1024, needed)))
    return row_tile, chunk, vmem_limit


def pix2struct_layer_norm(hidden_states, weight, bias, *, eps=1e-6):
    """hidden_states: (..., H); weight, bias: (H,)."""
    orig_shape = hidden_states.shape
    H = orig_shape[-1]
    x2d = hidden_states.reshape(-1, H)
    rows = x2d.shape[0]
    itemsize = jnp.dtype(hidden_states.dtype).itemsize

    row_tile, chunk, vmem_limit = _choose_tiles(
        rows, H, hidden_states.dtype, _vmem_capacity_bytes())
    assert row_tile % chunk == 0

    # weight / bias as lane-aligned (1, H) blocks, resident in VMEM for the
    # whole grid (constant index_map).
    w2d = weight.reshape(1, H)
    b2d = bias.reshape(1, H)

    # Ragged last block handled by Pallas (rows are independent; OOB stores
    # are masked) -> no wrapper-side jnp.pad / slice.
    grid = (pl.cdiv(rows, row_tile),)

    cost = pl.CostEstimate(
        flops=10 * rows * H,
        transcendentals=rows,
        bytes_accessed=2 * rows * H * itemsize
        + 2 * H * jnp.dtype(weight.dtype).itemsize,
    )

    out = pl.pallas_call(
        functools.partial(_layernorm_kernel, eps=eps, chunk=chunk),
        out_shape=jax.ShapeDtypeStruct((rows, H), hidden_states.dtype),
        grid_spec=pltpu.PrefetchScalarGridSpec(
            num_scalar_prefetch=0,
            grid=grid,
            in_specs=[
                pl.BlockSpec((row_tile, H), lambda i: (i, 0)),
                pl.BlockSpec((1, H), lambda i: (0, 0)),
                pl.BlockSpec((1, H), lambda i: (0, 0)),
            ],
            out_specs=pl.BlockSpec((row_tile, H), lambda i: (i, 0)),
        ),
        compiler_params=pltpu.CompilerParams(
            dimension_semantics=("parallel",),   # row axis shards across TCs
            vmem_limit_bytes=vmem_limit,
        ),
        cost_estimate=cost,
    )(x2d, w2d, b2d)

    return out.reshape(orig_shape)


def _reference_layer_norm(x, weight, bias, eps=1e-6):
    xf = x.astype(jnp.float32)
    mean = jnp.mean(xf, axis=-1, keepdims=True)
    var = jnp.mean((xf - mean) ** 2, axis=-1, keepdims=True)
    y = (xf - mean) / jnp.sqrt(var + eps)
    return (y * weight + bias).astype(x.dtype)


if __name__ == "__main__":
    key = jax.random.PRNGKey(0)
    k_x, k_w, k_b = jax.random.split(key, 3)

    batch, seq, hidden = 2, 8, 32
    x = jax.random.normal(k_x, (batch, seq, hidden), dtype=jnp.float32)

    # nn.LayerNorm params: weight init to ones, bias to zeros. Perturb
    # deterministically so the affine path is actually exercised.
    weight = jnp.ones((hidden,), jnp.float32) + 0.1 * jax.random.normal(
        k_w, (hidden,), dtype=jnp.float32)
    bias = 0.1 * jax.random.normal(k_b, (hidden,), dtype=jnp.float32)

    out = pix2struct_layer_norm(x, weight, bias, eps=1e-6)
    out = jax.block_until_ready(out)

    ref = _reference_layer_norm(x, weight, bias, eps=1e-6)
    assert out.shape == x.shape and out.dtype == x.dtype
    assert jnp.allclose(out, ref, atol=1e-5, rtol=1e-5), "mismatch vs reference"

    print("KERNEL_OK")
</pallas_src>

<mosaic_0001>
module attributes {stable_mosaic.version = 11 : i64} {
  func.func @_layernorm_kernel(%arg0: i32, %arg1: memref<16x32xf32, #tpu.memory_space<vmem>>, %arg2: memref<1x32xf32, #tpu.memory_space<vmem>>, %arg3: memref<1x32xf32, #tpu.memory_space<vmem>>, %arg4: memref<16x32xf32, #tpu.memory_space<vmem>>) attributes {dimension_semantics = [#tpu.dimension_semantics<parallel>], iteration_bounds = array<i64: 1>, scalar_prefetch = 0 : i64, scratch_operands = 0 : i64, tpu.core_type = #tpu.core_type<tc>, window_params = [{transform_indices = @transform_0, window_bounds = array<i64: 16, 32>}, {pipeline_mode = #tpu.pipeline_mode<synchronous>, transform_indices = @transform_1, window_bounds = array<i64: 1, 32>}, {pipeline_mode = #tpu.pipeline_mode<synchronous>, transform_indices = @transform_2, window_bounds = array<i64: 1, 32>}, {transform_indices = @transform_3, window_bounds = array<i64: 16, 32>}]} {
    %c0 = arith.constant 0 : index
    %c0_0 = arith.constant 0 : index
    %0 = vector.load %arg2[%c0, %c0_0] : memref<1x32xf32, #tpu.memory_space<vmem>>, vector<1x32xf32>
    %c0_1 = arith.constant 0 : index
    %c0_2 = arith.constant 0 : index
    %1 = vector.load %arg3[%c0_1, %c0_2] : memref<1x32xf32, #tpu.memory_space<vmem>>, vector<1x32xf32>
    %c0_i32 = arith.constant 0 : i32
    %c1_i32 = arith.constant 1 : i32
    %2 = arith.muli %c0_i32, %c1_i32 : i32
    %c0_i32_3 = arith.constant 0 : i32
    %3 = arith.addi %c0_i32_3, %2 : i32
    %c16_i32 = arith.constant 16 : i32
    %4 = arith.muli %3, %c16_i32 : i32
    %5 = tpu.assume_multiple %4, 16 : i32
    %6 = arith.index_cast %5 : i32 to index
    %c0_4 = arith.constant 0 : index
    %7 = vector.load %arg1[%6, %c0_4] : memref<16x32xf32, #tpu.memory_space<vmem>>, vector<16x32xf32>
    %cst = arith.constant dense<0.000000e+00> : vector<16xf32>
    %8 = vector.multi_reduction <add>, %7, %cst [1] : vector<16x32xf32> to vector<16xf32>
    %9 = vector.shape_cast %8 : vector<16xf32> to vector<16x1xf32>
    %cst_5 = arith.constant 3.125000e-02 : f32
    %10 = vector.broadcast %cst_5 : f32 to vector<16x1xf32>
    %11 = arith.mulf %9, %10 : vector<16x1xf32>
    %12 = vector.broadcast %11 : vector<16x1xf32> to vector<16x32xf32>
    %13 = arith.subf %7, %12 : vector<16x32xf32>
    %14 = arith.mulf %13, %13 : vector<16x32xf32>
    %cst_6 = arith.constant dense<0.000000e+00> : vector<16xf32>
    %15 = vector.multi_reduction <add>, %14, %cst_6 [1] : vector<16x32xf32> to vector<16xf32>
    %16 = vector.shape_cast %15 : vector<16xf32> to vector<16x1xf32>
    %cst_7 = arith.constant 3.125000e-02 : f32
    %17 = vector.broadcast %cst_7 : f32 to vector<16x1xf32>
    %18 = arith.mulf %16, %17 : vector<16x1xf32>
    %cst_8 = arith.constant 9.99999997E-7 : f32
    %19 = vector.broadcast %cst_8 : f32 to vector<16x1xf32>
    %20 = arith.addf %18, %19 : vector<16x1xf32>
    %21 = math.rsqrt %20 : vector<16x1xf32>
    %22 = vector.broadcast %21 : vector<16x1xf32> to vector<16x32xf32>
    %23 = arith.mulf %13, %22 : vector<16x32xf32>
    %24 = vector.broadcast %0 : vector<1x32xf32> to vector<16x32xf32>
    %25 = arith.mulf %23, %24 : vector<16x32xf32>
    %26 = vector.broadcast %1 : vector<1x32xf32> to vector<16x32xf32>
    %27 = arith.addf %25, %26 : vector<16x32xf32>
    %28 = arith.index_cast %5 : i32 to index
    %c0_9 = arith.constant 0 : index
    %29 = vector.load %arg4[%28, %c0_9] : memref<16x32xf32, #tpu.memory_space<vmem>>, vector<16x32xf32>
    tpu.vector_store %arg4[%28, %c0_9], %27 {strides = array<i32>} : memref<16x32xf32, #tpu.memory_space<vmem>>, vector<16x32xf32>,
    %c1_i32_10 = arith.constant 1 : i32
    return
  }
  func.func @transform_0(%arg0: i32) -> (i32, i32) {
    %c0_i32 = arith.constant 0 : i32
    %c0_i32_0 = arith.constant 0 : i32
    return %arg0, %c0_i32 : i32, i32
  }
  func.func @transform_1(%arg0: i32) -> (i32, i32) {
    %c0_i32 = arith.constant 0 : i32
    %c0_i32_0 = arith.constant 0 : i32
    %c0_i32_1 = arith.constant 0 : i32
    return %c0_i32, %c0_i32_0 : i32, i32
  }
  func.func @transform_2(%arg0: i32) -> (i32, i32) {
    %c0_i32 = arith.constant 0 : i32
    %c0_i32_0 = arith.constant 0 : i32
    %c0_i32_1 = arith.constant 0 : i32
    return %c0_i32, %c0_i32_0 : i32, i32
  }
  func.func @transform_3(%arg0: i32) -> (i32, i32) {
    %c0_i32 = arith.constant 0 : i32
    %c0_i32_0 = arith.constant 0 : i32
    return %arg0, %c0_i32 : i32, i32
  }
}

</mosaic_0001>

<llo_original>
// kernel: tpu_custom_call.1
$region0: #{tpu_custom_call.1}
  #allocation0 [shape = 'u32[]', space=smem, size = 0x4, offset = 0x4, fixed_abs, tag = 'smem constant byte address 0x4 - core index']
  #allocation1 [shape = 'u32[144,128]{1,0:T(1,128)}', space=vmem, size = 0x12000, scoped, tag = 'internal scratch']
  %s0 = inlined_call_operand.hbm [shape: f32[16,32], index: 0, kind: input, shape index: {}]
  %s1 = inlined_call_operand.vmem [shape: f32[1,32], index: 1, kind: input, shape index: {}]
  %s2 = inlined_call_operand.vmem [shape: f32[1,32], index: 2, kind: input, shape index: {}]
  %s3 = inlined_call_operand.hbm [shape: f32[16,32], index: 3, kind: output, shape index: {}]
  %s4 = sld [smem:[#allocation0]]
  $region26: #{tpu_custom_call.1} parent=0
    _
  %s6 = ssub.s32 1, %s4
  %s7 = scalar_select 0, %s6, %s4
  $region1: #{tpu_custom_call.1} parent=0
    #allocation2 [shape = 'u8[8192]{0}', space=vmem, size = 0x2000, scoped, tag = 'input window, operand 0, single buffered']
    #allocation3 [shape = 's32[1]{0}', space=sflag, size = 0x4, scoped, tag = 'scoped memory for tpu_custom_call.1']
    #allocation4 [shape = 's32[1]{0}', space=sflag, size = 0x4, scoped, tag = 'scoped memory for tpu_custom_call.1']
    #allocation5 [shape = 'u8[8192]{0}', space=vmem, size = 0x2000, scoped, tag = 'output window, operand 0, single buffered']
    %8 = vsyncpa [#allocation3], 0
    %9 = vsyncpa [#allocation4], 0
    // Predicated region
    $region2: #{tpu_custom_call.1} parent=1 // pred_check
      _
    $region3: #{tpu_custom_call.1} parent=1 // pred_check_branch
      %11 = sbr.rel (0) target = $region5
    $region4: #{tpu_custom_call.1} parent=1 // pred_region
      %s13 = ssub.s32 256, 256
      %14 = vsyncadd [#allocation3], %s13
      %s15 = sshll.u32 [#allocation2], 4
      %s16 = int_to_ptr.vmem [resolvable:$true] %s15
      %21 = dma.hbm_to_vmem [thread:$0]  %s0, 256, %s16, [#allocation3], 128, 128, 8
    $region5: #{tpu_custom_call.1} parent=1 // pred_fallthru
      _
    // Predicated region
    $region6: #{tpu_custom_call.1} parent=1 // pred_check
      _
    $region7: #{tpu_custom_call.1} parent=1 // pred_check_branch
      %23 = sbr.rel (0) target = $region9
    $region8: #{tpu_custom_call.1} parent=1 // pred_region
      _
    $region9: #{tpu_custom_call.1} parent=1 // pred_fallthru
      _
    // Predicated region
    $region10: #{tpu_custom_call.1} parent=1 // pred_check
      _
    $region11: #{tpu_custom_call.1} parent=1 // pred_check_branch
      %25 = sbr.rel (0) target = $region13
    $region12: #{tpu_custom_call.1} parent=1 // pred_region
      _
    $region13: #{tpu_custom_call.1} parent=1 // pred_fallthru
      _
    // Predicated region
    $region14: #{tpu_custom_call.1} parent=1 // pred_check
      _
    $region15: #{tpu_custom_call.1} parent=1 // pred_check_branch
      %27 = sbr.rel (0) target = $region17
    $region16: #{tpu_custom_call.1} parent=1 // pred_region
      %28 = dma.done [#allocation3], 256
    $region17: #{tpu_custom_call.1} parent=1 // pred_fallthru
      _
    %v29 = vld [vmem:[%s1] sm:$0x1]
    %v30 = vld [vmem:[%s2] sm:$0x1]
    %v31 = vld [vmem:[#allocation2] sm:$0xff]
    %v32 = vld [vmem:[#allocation2 + $0x8] sm:$0xff]
    %vm33 = vcmask 261120
    %v34 = vsel %vm33, %v31, 0.0
    %35 = vadd.xlane.f32.xlu0 %v34
    %v36 = vpop.xlane.xlu0 %35
    %v37 = vsel %vm33, %v32, 0.0
    %38 = vadd.xlane.f32.xlu0 %v37
    %v39 = vpop.xlane.xlu0 %38
    %v40 = vmul.f32 %v36, 0.03125
    %v41 = vmul.f32 %v39, 0.03125
    %v42 = vsub.f32 %v31, %v40
    %v43 = vsub.f32 %v32, %v41
    %v44 = vmul.f32 %v42, %v42
    %v45 = vmul.f32 %v43, %v43
    %v46 = vsel %vm33, %v44, 0.0
    %47 = vadd.xlane.f32.xlu0 %v46
    %v48 = vpop.xlane.xlu0 %47
    %v49 = vsel %vm33, %v45, 0.0
    %50 = vadd.xlane.f32.xlu0 %v49
    %v51 = vpop.xlane.xlu0 %50
    %v52 = vmul.f32 %v48, 0.03125
    %v53 = vmul.f32 %v51, 0.03125
    %v54 = vadd.f32 %v52, 1e-06
    %v55 = vadd.f32 %v53, 1e-06
    %v56 = vrsqrt.pop %v54
    %v57 = vrsqrt.pop %v55
    %v58 = vmul.f32 %v42, %v56
    %v59 = vmul.f32 %v43, %v57
    %v61 = vlaneseq
    %v62 = vshrl.u32 %v61, 7
    %v63 = vsub.s32 0, %v62
    %v64 = vrot.slane %v29, %v63
    %v66 = vmul.f32 %v58, %v64
    %v67 = vmul.f32 %v59, %v64
    %v69 = vlaneseq
    %v70 = vshrl.u32 %v69, 7
    %v71 = vsub.s32 0, %v70
    %v72 = vrot.slane %v30, %v71
    %v74 = vadd.f32 %v66, %v72
    %v75 = vadd.f32 %v67, %v72
    %76 = vst.msk [vmem:[#allocation5] sm:$0xff] %vm33, %v74
    %77 = vst.msk [vmem:[#allocation5 + $0x8] sm:$0xff] %vm33, %v75
    // Predicated region
    $region18: #{tpu_custom_call.1} parent=1 // pred_check
      _
    $region19: #{tpu_custom_call.1} parent=1 // pred_check_branch
      %79 = sbr.rel (0) target = $region21
    $region20: #{tpu_custom_call.1} parent=1 // pred_region
      %s81 = ssub.s32 256, 256
      %82 = vsyncadd [#allocation4], %s81
      %s83 = sshll.u32 [#allocation5], 4
      %s84 = int_to_ptr.vmem [resolvable:$true] %s83
      %89 = dma.vmem_to_hbm [thread:$0]  %s84, 256, %s3, [#allocation4], 128, 128, 8
    $region21: #{tpu_custom_call.1} parent=1 // pred_fallthru
      _
    // Predicated region
    $region22: #{tpu_custom_call.1} parent=1 // pred_check
      _
    $region23: #{tpu_custom_call.1} parent=1 // pred_check_branch
      %91 = sbr.rel (0) target = $region25
    $region24: #{tpu_custom_call.1} parent=1 // pred_region
      %92 = dma.done [#allocation4], 256
    $region25: #{tpu_custom_call.1} parent=1 // pred_fallthru
      _
    %93 = vsyncpa [#allocation3], 1
    %94 = vsyncpa [#allocation4], 1

</llo_original>
